<compile_context>
chip_gen: v7x
topology: tpu7x:2x2x1
jax: 0.10.0
libtpu: 0.0.40
codegen_flags: <defaults>
</compile_context>

<pallas_src>
import functools
import math

import jax
import jax.numpy as jnp
from jax.experimental import pallas as pl
from jax.experimental.pallas import tpu as pltpu


def _round_up(x, m):
    return ((x + m - 1) // m) * m


def _arc_ce_kernel(cos_ref, tlogit_ref, scost_ref, out_ref, m_scr, l_scr, *,
                   s, num_classes, tc):
    """One (batch-tile, class-tile) step of the online-logsumexp ArcFace CE."""
    ci = pl.program_id(1)
    n_c = pl.num_programs(1)

    @pl.when(ci == 0)
    def _init():
        m_scr[...] = jnp.full_like(m_scr, -jnp.inf)
        l_scr[...] = jnp.zeros_like(l_scr)

    # Single per-element multiply (plus cast for bf16 inputs).
    logits = cos_ref[...].astype(jnp.float32) * s              # (TB, TC)

    def update(lg):
        m_old = m_scr[...]
        m_new = jnp.maximum(m_old, jnp.max(lg, axis=1, keepdims=True))
        l_scr[...] = l_scr[...] * jnp.exp(m_old - m_new) + jnp.sum(
            jnp.exp(lg - m_new), axis=1, keepdims=True)
        m_scr[...] = m_new

    rem = num_classes % tc
    if rem == 0:
        # Aligned class count: every tile fully valid, zero masking cost.
        update(logits)
    else:
        # Ragged last class tile overhangs the array; the overhang holds
        # undefined data and MUST be masked before max/exp.  Only the last
        # tile pays the iota/compare/select.
        @pl.when(ci < n_c - 1)
        def _full():
            update(logits)

        @pl.when(ci == n_c - 1)
        def _masked():
            col = jax.lax.broadcasted_iota(jnp.int32, logits.shape, 1)
            update(jnp.where(col < rem, logits, -jnp.inf))

    @pl.when(ci == n_c - 1)
    def _epilogue():
        m = m_scr[...]
        l = l_scr[...]
        t_logit = tlogit_ref[...]      # s * phi(target)  (TB, 1), f32
        t_plain = scost_ref[...]       # s * cos(target)  (TB, 1), f32
        # Swap the target column's plain logit for its margin logit inside the
        # softmax denominator.  phi <= cos_t, so the running max over the plain
        # logits remains a valid stability bound and l stays > 0.
        l = l + jnp.exp(t_logit - m) - jnp.exp(t_plain - m)
        out_ref[...] = m + jnp.log(l) - t_logit        # per-row CE loss


_CORE_PARALLEL_OK = None  # lazily resolved: does this chip accept CORE_PARALLEL?


def arc_margin_cross_entropy(cosine, target, m=0.5, s=30.0, m_cos=0.3, *,
                             tb=256, tc=8192,
                             vmem_limit_bytes=40 * 1024 * 1024):
    """cosine: [B, C] float (f32 or bf16), target: [B] int -> scalar f32 loss.

    `m_cos` is kept for interface parity with the torch module (unused in its
    forward pass)."""
    global _CORE_PARALLEL_OK
    del m_cos  # unused by the reference forward

    B, C = cosine.shape

    # --- tile sizing: (8, 128)-aligned, clamped to the problem, large enough
    # to amortize the ~0.35us/grid-step overhead, small enough to leave VMEM
    # headroom on v7x (64 MiB / TensorCore).
    tb = max(8, _round_up(int(tb), 8))
    tc = max(128, _round_up(int(tc), 128))
    tc = min(tc, _round_up(C, 128))
    tb = min(tb, _round_up(B, 8))
    # Give each v7x TensorCore at least one batch tile when B is big enough
    # that halving tb does not shrink blocks into per-step-overhead territory.
    tb = min(tb, max(64, _round_up(pl.cdiv(B, 2), 8)))

    grid = (pl.cdiv(B, tb), pl.cdiv(C, tc))

    # --- per-row (B, 1) precompute: gather the target cosine once and apply
    # the ArcFace margin once per row (B sqrts total, none inside the kernel).
    cos_m, sin_m = math.cos(m), math.sin(m)
    th, mm = math.cos(math.pi - m), math.sin(math.pi - m) * m
    tgt = target.astype(jnp.int32)[:, None]                              # (B, 1)
    tgt_cos = jnp.take_along_axis(cosine, tgt, axis=1).astype(jnp.float32)
    sine = jnp.sqrt(jnp.maximum(1.0 - tgt_cos * tgt_cos, 0.0))
    phi = tgt_cos * cos_m - sine * sin_m
    phi = jnp.where(tgt_cos > th, phi, tgt_cos - mm)
    tgt_logit = (s * phi).astype(jnp.float32)                            # (B, 1)
    s_cos_t = (s * tgt_cos).astype(jnp.float32)                          # (B, 1)

    kernel = functools.partial(_arc_ce_kernel, s=float(s), num_classes=C, tc=tc)

    cost = pl.CostEstimate(
        flops=4 * B * C,
        transcendentals=B * C + 2 * B,
        bytes_accessed=B * C * cosine.dtype.itemsize + 12 * B,
    )

    def run(batch_sem):
        return pl.pallas_call(
            kernel,
            out_shape=jax.ShapeDtypeStruct((B, 1), jnp.float32),
            grid=grid,
            in_specs=[
                pl.BlockSpec((tb, tc), lambda bi, ci: (bi, ci)),   # cosine tile
                pl.BlockSpec((tb, 1), lambda bi, ci: (bi, 0)),     # s * phi(target)
                pl.BlockSpec((tb, 1), lambda bi, ci: (bi, 0)),     # s * cos(target)
            ],
            out_specs=pl.BlockSpec((tb, 1), lambda bi, ci: (bi, 0)),
            scratch_shapes=[pltpu.VMEM((tb, 1), jnp.float32),      # running max
                            pltpu.VMEM((tb, 1), jnp.float32)],     # running sum-exp
            compiler_params=pltpu.CompilerParams(
                dimension_semantics=(batch_sem, pltpu.ARBITRARY),
                vmem_limit_bytes=vmem_limit_bytes,
            ),
            cost_estimate=cost,
        )(cosine, tgt_logit, s_cos_t)

    # Prefer an explicit 2-TensorCore split of the batch axis (v7x); fall back
    # to plain PARALLEL on chips/compilers that reject CORE_PARALLEL.
    if grid[0] >= 2 and _CORE_PARALLEL_OK is not False:
        try:
            per_row = run(pltpu.CORE_PARALLEL)
            _CORE_PARALLEL_OK = True
        except Exception:
            _CORE_PARALLEL_OK = False
            per_row = run(pltpu.PARALLEL)
    else:
        per_row = run(pltpu.PARALLEL)

    # TODO(synk): torch CrossEntropyLoss ignore_index / label_smoothing semantics
    # are not handled (defaults assumed).
    return jnp.mean(per_row)


if __name__ == "__main__":
    key = jax.random.PRNGKey(0)
    k1, k2 = jax.random.split(key)

    B, C = 8, 512
    cosine = jax.random.uniform(k1, (B, C), jnp.float32, minval=-0.99, maxval=0.99)
    target = jax.random.randint(k2, (B,), 0, C, dtype=jnp.int32)

    def ref(cosine, target, m=0.5, s=30.0):
        cos_m, sin_m = math.cos(m), math.sin(m)
        th, mm = math.cos(math.pi - m), math.sin(math.pi - m) * m
        sine = jnp.sqrt(jnp.maximum(1.0 - cosine ** 2, 0.0))
        phi = cosine * cos_m - sine * sin_m
        phi = jnp.where(cosine > th, phi, cosine - mm)
        one_hot = jax.nn.one_hot(target, cosine.shape[1], dtype=cosine.dtype)
        logits = (one_hot * phi + (1.0 - one_hot) * cosine) * s
        logp = jax.nn.log_softmax(logits, axis=1)
        return -jnp.mean(jnp.sum(one_hot * logp, axis=1))

    # 1) small tiles -> exercises the multi-class-tile online-logsumexp path
    loss = arc_margin_cross_entropy(cosine, target, tb=8, tc=128)
    jax.block_until_ready(loss)
    assert jnp.allclose(loss, ref(cosine, target), rtol=1e-5, atol=1e-5)

    # 2) default (single class tile) path
    loss2 = arc_margin_cross_entropy(cosine, target)
    jax.block_until_ready(loss2)
    assert jnp.allclose(loss2, ref(cosine, target), rtol=1e-5, atol=1e-5)

    # 3) bf16 input streamed without wrapper upcast (kernel casts per tile)
    cos_bf16 = cosine.astype(jnp.bfloat16)
    loss3 = arc_margin_cross_entropy(cos_bf16, target, tb=8, tc=128)
    jax.block_until_ready(loss3)
    assert jnp.allclose(loss3, ref(cos_bf16.astype(jnp.float32), target),
                        rtol=1e-4, atol=1e-4)

    # 4) unaligned shapes -> overhanging edge blocks + ragged-last-tile mask
    B2, C2 = 5, 300
    cos2 = jax.random.uniform(jax.random.PRNGKey(1), (B2, C2), jnp.float32,
                              minval=-0.99, maxval=0.99)
    tgt2 = jax.random.randint(jax.random.PRNGKey(2), (B2,), 0, C2, dtype=jnp.int32)
    loss4 = arc_margin_cross_entropy(cos2, tgt2, tb=8, tc=128)
    jax.block_until_ready(loss4)
    assert jnp.allclose(loss4, ref(cos2, tgt2), rtol=1e-5, atol=1e-5)

    # 5) unaligned shapes with the large default tiles (tc clamps to round_up(C,128))
    loss5 = arc_margin_cross_entropy(cos2, tgt2)
    jax.block_until_ready(loss5)
    assert jnp.allclose(loss5, ref(cos2, tgt2), rtol=1e-5, atol=1e-5)

    print("KERNEL_OK")
</pallas_src>

<mosaic_0001>
module attributes {stable_mosaic.version = 11 : i64} {
  func.func @_arc_ce_kernel(%arg0: i32, %arg1: i32, %arg2: memref<8x128xf32, #tpu.memory_space<vmem>>, %arg3: memref<8x1xf32, #tpu.memory_space<vmem>>, %arg4: memref<8x1xf32, #tpu.memory_space<vmem>>, %arg5: memref<8x1xf32, #tpu.memory_space<vmem>>, %arg6: memref<8x1xf32, #tpu.memory_space<vmem>>, %arg7: memref<8x1xf32, #tpu.memory_space<vmem>>) attributes {dimension_semantics = [#tpu.dimension_semantics<parallel>, #tpu.dimension_semantics<arbitrary>], iteration_bounds = array<i64: 1, 4>, scalar_prefetch = 0 : i64, scratch_operands = 2 : i64, tpu.core_type = #tpu.core_type<tc>, window_params = [{transform_indices = @transform_0, window_bounds = array<i64: 8, 128>}, {transform_indices = @transform_1, window_bounds = array<i64: 8, 1>}, {transform_indices = @transform_2, window_bounds = array<i64: 8, 1>}, {transform_indices = @transform_3, window_bounds = array<i64: 8, 1>}]} {
    %c0_i32 = arith.constant 0 : i32
    %0 = arith.cmpi eq, %arg1, %c0_i32 : i32
    %1 = arith.extui %0 : i1 to i32
    %c0_i32_0 = arith.constant 0 : i32
    %2 = arith.cmpi ne, %1, %c0_i32_0 : i32
    scf.if %2 {
      %cst_13 = arith.constant 0xFF800000 : f32
      %25 = vector.broadcast %cst_13 : f32 to vector<8x1xf32>
      %c0_14 = arith.constant 0 : index
      %c0_15 = arith.constant 0 : index
      %26 = vector.load %arg6[%c0_14, %c0_15] : memref<8x1xf32, #tpu.memory_space<vmem>>, vector<8x1xf32>
      tpu.vector_store %arg6[%c0_14, %c0_15], %25 {strides = array<i32>} : memref<8x1xf32, #tpu.memory_space<vmem>>, vector<8x1xf32>,
      %cst_16 = arith.constant 0.000000e+00 : f32
      %27 = vector.broadcast %cst_16 : f32 to vector<8x1xf32>
      %c0_17 = arith.constant 0 : index
      %c0_18 = arith.constant 0 : index
      %28 = vector.load %arg7[%c0_17, %c0_18] : memref<8x1xf32, #tpu.memory_space<vmem>>, vector<8x1xf32>
      tpu.vector_store %arg7[%c0_17, %c0_18], %27 {strides = array<i32>} : memref<8x1xf32, #tpu.memory_space<vmem>>, vector<8x1xf32>,
    } else {
    }
    %c0 = arith.constant 0 : index
    %c0_1 = arith.constant 0 : index
    %3 = vector.load %arg2[%c0, %c0_1] : memref<8x128xf32, #tpu.memory_space<vmem>>, vector<8x128xf32>
    %cst = arith.constant 3.000000e+01 : f32
    %4 = vector.broadcast %cst : f32 to vector<8x128xf32>
    %5 = arith.mulf %3, %4 : vector<8x128xf32>
    %c0_2 = arith.constant 0 : index
    %c0_3 = arith.constant 0 : index
    %6 = vector.load %arg6[%c0_2, %c0_3] : memref<8x1xf32, #tpu.memory_space<vmem>>, vector<8x1xf32>
    %cst_4 = arith.constant dense<0xFF800000> : vector<8xf32>
    %7 = vector.multi_reduction <maximumf>, %5, %cst_4 [1] : vector<8x128xf32> to vector<8xf32>
    %8 = vector.shape_cast %7 : vector<8xf32> to vector<8x1xf32>
    %9 = arith.maximumf %6, %8 : vector<8x1xf32>
    %c0_5 = arith.constant 0 : index
    %c0_6 = arith.constant 0 : index
    %10 = vector.load %arg7[%c0_5, %c0_6] : memref<8x1xf32, #tpu.memory_space<vmem>>, vector<8x1xf32>
    %11 = arith.subf %6, %9 : vector<8x1xf32>
    %12 = math.exp %11 : vector<8x1xf32>
    %13 = arith.mulf %10, %12 : vector<8x1xf32>
    %14 = vector.broadcast %9 : vector<8x1xf32> to vector<8x128xf32>
    %15 = arith.subf %5, %14 : vector<8x128xf32>
    %16 = math.exp %15 : vector<8x128xf32>
    %cst_7 = arith.constant dense<0.000000e+00> : vector<8xf32>
    %17 = vector.multi_reduction <add>, %16, %cst_7 [1] : vector<8x128xf32> to vector<8xf32>
    %18 = vector.shape_cast %17 : vector<8xf32> to vector<8x1xf32>
    %19 = arith.addf %13, %18 : vector<8x1xf32>
    %c0_8 = arith.constant 0 : index
    %c0_9 = arith.constant 0 : index
    %20 = vector.load %arg7[%c0_8, %c0_9] : memref<8x1xf32, #tpu.memory_space<vmem>>, vector<8x1xf32>
    tpu.vector_store %arg7[%c0_8, %c0_9], %19 {strides = array<i32>} : memref<8x1xf32, #tpu.memory_space<vmem>>, vector<8x1xf32>,
    %c0_10 = arith.constant 0 : index
    %c0_11 = arith.constant 0 : index
    %21 = vector.load %arg6[%c0_10, %c0_11] : memref<8x1xf32, #tpu.memory_space<vmem>>, vector<8x1xf32>
    tpu.vector_store %arg6[%c0_10, %c0_11], %9 {strides = array<i32>} : memref<8x1xf32, #tpu.memory_space<vmem>>, vector<8x1xf32>,
    %c3_i32 = arith.constant 3 : i32
    %22 = arith.cmpi eq, %arg1, %c3_i32 : i32
    %23 = arith.extui %22 : i1 to i32
    %c0_i32_12 = arith.constant 0 : i32
    %24 = arith.cmpi ne, %23, %c0_i32_12 : i32
    scf.if %24 {
      %c0_13 = arith.constant 0 : index
      %c0_14 = arith.constant 0 : index
      %25 = vector.load %arg6[%c0_13, %c0_14] : memref<8x1xf32, #tpu.memory_space<vmem>>, vector<8x1xf32>
      %c0_15 = arith.constant 0 : index
      %c0_16 = arith.constant 0 : index
      %26 = vector.load %arg7[%c0_15, %c0_16] : memref<8x1xf32, #tpu.memory_space<vmem>>, vector<8x1xf32>
      %c0_17 = arith.constant 0 : index
      %c0_18 = arith.constant 0 : index
      %27 = vector.load %arg3[%c0_17, %c0_18] : memref<8x1xf32, #tpu.memory_space<vmem>>, vector<8x1xf32>
      %c0_19 = arith.constant 0 : index
      %c0_20 = arith.constant 0 : index
      %28 = vector.load %arg4[%c0_19, %c0_20] : memref<8x1xf32, #tpu.memory_space<vmem>>, vector<8x1xf32>
      %29 = arith.subf %27, %25 : vector<8x1xf32>
      %30 = math.exp %29 : vector<8x1xf32>
      %31 = arith.addf %26, %30 : vector<8x1xf32>
      %32 = arith.subf %28, %25 : vector<8x1xf32>
      %33 = math.exp %32 : vector<8x1xf32>
      %34 = arith.subf %31, %33 : vector<8x1xf32>
      %35 = math.log %34 : vector<8x1xf32>
      %36 = arith.addf %25, %35 : vector<8x1xf32>
      %37 = arith.subf %36, %27 : vector<8x1xf32>
      %c0_21 = arith.constant 0 : index
      %c0_22 = arith.constant 0 : index
      %38 = vector.load %arg5[%c0_21, %c0_22] : memref<8x1xf32, #tpu.memory_space<vmem>>, vector<8x1xf32>
      tpu.vector_store %arg5[%c0_21, %c0_22], %37 {strides = array<i32>} : memref<8x1xf32, #tpu.memory_space<vmem>>, vector<8x1xf32>,
    } else {
    }
    return
  }
  func.func @transform_0(%arg0: i32, %arg1: i32) -> (i32, i32) {
    %c0_i32 = arith.constant 0 : i32
    return %arg0, %arg1 : i32, i32
  }
  func.func @transform_1(%arg0: i32, %arg1: i32) -> (i32, i32) {
    %c0_i32 = arith.constant 0 : i32
    %c0_i32_0 = arith.constant 0 : i32
    return %arg0, %c0_i32 : i32, i32
  }
  func.func @transform_2(%arg0: i32, %arg1: i32) -> (i32, i32) {
    %c0_i32 = arith.constant 0 : i32
    %c0_i32_0 = arith.constant 0 : i32
    return %arg0, %c0_i32 : i32, i32
  }
  func.func @transform_3(%arg0: i32, %arg1: i32) -> (i32, i32) {
    %c0_i32 = arith.constant 0 : i32
    %c0_i32_0 = arith.constant 0 : i32
    return %arg0, %c0_i32 : i32, i32
  }
}

</mosaic_0001>

<llo_original>
// kernel: tpu_custom_call.1
$region0: #{tpu_custom_call.1}
  #allocation0 [shape = 'u32[]', space=smem, size = 0x4, offset = 0x4, fixed_abs, tag = 'smem constant byte address 0x4 - core index']
  #allocation1 [shape = 'u32[144,128]{1,0:T(1,128)}', space=vmem, size = 0x12000, scoped, tag = 'internal scratch']
  #allocation2 [shape = 'f32[8,1]{1,0:T(8,128)}', space=vmem, size = 0x1000, scoped, tag = 'scratch operand']
  #allocation3 [shape = 'f32[8,1]{1,0:T(8,128)}', space=vmem, size = 0x1000, scoped, tag = 'scratch operand']
  %s0 = inlined_call_operand.hbm [shape: f32[8,512], index: 0, kind: input, shape index: {}]
  %s1 = inlined_call_operand.vmem [shape: f32[8,1], index: 1, kind: input, shape index: {}]
  %s2 = inlined_call_operand.vmem [shape: f32[8,1], index: 2, kind: input, shape index: {}]
  %s3 = inlined_call_operand.vmem [shape: f32[8,1], index: 3, kind: output, shape index: {}]
  %s4 = sld [smem:[#allocation0]]
  $region57: #{tpu_custom_call.1} parent=0
    _
  %s6 = ssub.s32 1, %s4
  %s7 = scalar_select 0, %s6, %s4
  $region1: #{tpu_custom_call.1} parent=0
    #allocation4 [shape = 'u8[8192]{0}', space=vmem, size = 0x2000, scoped, tag = 'input window, operand 0']
    #allocation5 [shape = 's32[2]{0}', space=sflag, size = 0x8, scoped, tag = 'scoped memory for tpu_custom_call.1']
    %8 = vsyncpa [#allocation5], 0
    %s9 = scalar_lea.sflag [#allocation5], 1
    %10 = vsyncpa %s9, 0
    loop: start=0, step=1, limit=6
    $region2: #{tpu_custom_call.1} parent=1 // loop_pre_header
      _
    $region3: #{tpu_custom_call.1} parent=1 // loop_header
      %s12 = sphi 0, %s16
      %p13 = scmp.ge.s32.totalorder %s12, 6
      %s19 = sphi 0, %s31
      %s20 = sphi 0, %s27
      %s21 = sphi 0, %s19
      %s22 = sphi 0, %s20
      %s23 = sphi 0, %s21
      %s24 = sphi 0, %s22
      %s36 = sphi 0, %s38
      %s39 = sphi 0, %s36
      %s40 = sphi 0, %s39
      %s56 = sphi 0, %s40
      %s62 = sphi 0, %s64
      %s65 = sphi 0, %s62
      %s66 = sphi 0, %s65
      %s82 = sphi 0, %s66
      %s88 = sphi 0, %s90
      %s91 = sphi 0, %s88
      %s92 = sphi 0, %s91
      %s108 = sphi 0, %s92
      %s114 = sphi 0, %s116
      %s117 = sphi 0, %s114
      %s118 = sphi 0, %s117
      %s134 = sphi 0, %s118
    $region4: #{tpu_custom_call.1} parent=1 // loop_header_branch
      %15 = sbr.rel (%p13) target = $region8
    $region5: #{tpu_custom_call.1} parent=1 // loop_body
      %s17 = ssub.s32 %s12, 1
      %s18 = ssub.s32 %s12, 2
      %s25 = sadd.s32 1, %s20
      %p26 = scmp.ge.s32.totalorder %s25, 4
      %s27 = scalar_select %p26, 0, %s25
      %s28 = sadd.s32 1, %s19
      %s29 = scalar_select %p26, %s28, %s19
      %p30 = scmp.ge.s32.totalorder %s29, 1
      %s31 = scalar_select %p30, 0, %s29
      %s32 = ssub.s32 %s19, %s31
      %s33 = ssub.s32 %s20, %s27
      %s34 = sor.u32 %s32, %s33
      %p35 = scmp.eq.s32.totalorder %s34, 0
      %s37 = sadd.s32 %s36, 1
      %s38 = scalar_select %p35, %s36, %s37
      %p41 = pneg %p35
      %p42 = scmp.eq.s32.totalorder %s12, 3
      %p43 = por %p41, %p42
      %p44 = scmp.ne.s32.totalorder %s36, %s39
      %p45 = scmp.eq.s32.totalorder %s12, 0
      %p46 = por %p44, %p45
      %p47 = scmp.ne.s32.totalorder %s36, %s39
      %p48 = scmp.eq.s32.totalorder %s17, 3
      %p49 = por %p47, %p48
      %p50 = scmp.ne.s32.totalorder %s39, %s40
      %p51 = scmp.eq.s32.totalorder %s17, 0
      %p52 = por %p50, %p51
      %p53 = scmp.ne.s32.totalorder %s39, %s40
      %p54 = scmp.eq.s32.totalorder %s18, 3
      %p55 = por %p53, %p54
      %p57 = scmp.ne.s32.totalorder %s40, %s56
      %p58 = scmp.eq.s32.totalorder %s18, 0
      %p59 = por %p57, %p58
      %s60 = ssub.s32 %s19, %s31
      %p61 = scmp.eq.s32.totalorder %s60, 0
      %s63 = sadd.s32 %s62, 1
      %s64 = scalar_select %p61, %s62, %s63
      %p67 = pneg %p61
      %p68 = scmp.eq.s32.totalorder %s12, 3
      %p69 = por %p67, %p68
      %p70 = scmp.ne.s32.totalorder %s62, %s65
      %p71 = scmp.eq.s32.totalorder %s12, 0
      %p72 = por %p70, %p71
      %p73 = scmp.ne.s32.totalorder %s62, %s65
      %p74 = scmp.eq.s32.totalorder %s17, 3
      %p75 = por %p73, %p74
      %p76 = scmp.ne.s32.totalorder %s65, %s66
      %p77 = scmp.eq.s32.totalorder %s17, 0
      %p78 = por %p76, %p77
      %p79 = scmp.ne.s32.totalorder %s65, %s66
      %p80 = scmp.eq.s32.totalorder %s18, 3
      %p81 = por %p79, %p80
      %p83 = scmp.ne.s32.totalorder %s66, %s82
      %p84 = scmp.eq.s32.totalorder %s18, 0
      %p85 = por %p83, %p84
      %s86 = ssub.s32 %s19, %s31
      %p87 = scmp.eq.s32.totalorder %s86, 0
      %s89 = sadd.s32 %s88, 1
      %s90 = scalar_select %p87, %s88, %s89
      %p93 = pneg %p87
      %p94 = scmp.eq.s32.totalorder %s12, 3
      %p95 = por %p93, %p94
      %p96 = scmp.ne.s32.totalorder %s88, %s91
      %p97 = scmp.eq.s32.totalorder %s12, 0
      %p98 = por %p96, %p97
      %p99 = scmp.ne.s32.totalorder %s88, %s91
      %p100 = scmp.eq.s32.totalorder %s17, 3
      %p101 = por %p99, %p100
      %p102 = scmp.ne.s32.totalorder %s91, %s92
      %p103 = scmp.eq.s32.totalorder %s17, 0
      %p104 = por %p102, %p103
      %p105 = scmp.ne.s32.totalorder %s91, %s92
      %p106 = scmp.eq.s32.totalorder %s18, 3
      %p107 = por %p105, %p106
      %p109 = scmp.ne.s32.totalorder %s92, %s108
      %p110 = scmp.eq.s32.totalorder %s18, 0
      %p111 = por %p109, %p110
      %s112 = ssub.s32 %s19, %s31
      %p113 = scmp.eq.s32.totalorder %s112, 0
      %s115 = sadd.s32 %s114, 1
      %s116 = scalar_select %p113, %s114, %s115
      %p119 = pneg %p113
      %p120 = scmp.eq.s32.totalorder %s12, 3
      %p121 = por %p119, %p120
      %p122 = scmp.ne.s32.totalorder %s114, %s117
      %p123 = scmp.eq.s32.totalorder %s12, 0
      %p124 = por %p122, %p123
      %p125 = scmp.ne.s32.totalorder %s114, %s117
      %p126 = scmp.eq.s32.totalorder %s17, 3
      %p127 = por %p125, %p126
      %p128 = scmp.ne.s32.totalorder %s117, %s118
      %p129 = scmp.eq.s32.totalorder %s17, 0
      %p130 = por %p128, %p129
      %p131 = scmp.ne.s32.totalorder %s117, %s118
      %p132 = scmp.eq.s32.totalorder %s18, 3
      %p133 = por %p131, %p132
      %p135 = scmp.ne.s32.totalorder %s118, %s134
      %p136 = scmp.eq.s32.totalorder %s18, 0
      %p137 = por %p135, %p136
      %p138 = scmp.le.s32.totalorder 1, %s12
      %p139 = scmp.lt.s32.totalorder %s12, 5
      %p140 = pnand %p138, %p139
      %p141 = pneg %p140
      // Predicated region
      $region9: #{tpu_custom_call.1} parent=5 // pred_check
        _
      $region10: #{tpu_custom_call.1} parent=5 // pred_check_branch
        %143 = sbr.rel (%p140) target = $region12
      $region11: #{tpu_custom_call.1} parent=5 // pred_region
        %s144 = ssub.s32 %s12, 1
        // Predicated region
        $region13: #{tpu_custom_call.1} parent=11 // pred_check
          %p145 = pneg %p78
        $region14: #{tpu_custom_call.1} parent=11 // pred_check_branch
          %147 = sbr.rel (%p145) target = $region16
        $region15: #{tpu_custom_call.1} parent=11 // pred_region
          %p148 = scmp.lt.s32.totalorder %s21, 0
          %s149 = scalar_select %p148, %s21, 0
          %s150 = smul.addr %s149, 8
          %s151 = scalar_lea.vmem %s1, %s150
        $region16: #{tpu_custom_call.1} parent=11 // pred_fallthru
          _
        // Predicated region
        $region17: #{tpu_custom_call.1} parent=11 // pred_check
          %p152 = pneg %p104
        $region18: #{tpu_custom_call.1} parent=11 // pred_check_branch
          %154 = sbr.rel (%p152) target = $region20
        $region19: #{tpu_custom_call.1} parent=11 // pred_region
          %p155 = scmp.lt.s32.totalorder %s21, 0
          %s156 = scalar_select %p155, %s21, 0
          %s157 = smul.addr %s156, 8
          %s158 = scalar_lea.vmem %s2, %s157
        $region20: #{tpu_custom_call.1} parent=11 // pred_fallthru
          _
      $region12: #{tpu_custom_call.1} parent=5 // pred_fallthru
        _
      %p159 = scmp.lt.s32.totalorder %s12, 4
      // Predicated region
      $region21: #{tpu_custom_call.1} parent=5 // pred_check
        %p160 = pneg %p159
      $region22: #{tpu_custom_call.1} parent=5 // pred_check_branch
        %162 = sbr.rel (%p160) target = $region24
      $region23: #{tpu_custom_call.1} parent=5 // pred_region
        // Predicated region
        $region25: #{tpu_custom_call.1} parent=23 // pred_check
          %p163 = pneg %p46
        $region26: #{tpu_custom_call.1} parent=23 // pred_check_branch
          %165 = sbr.rel (%p163) target = $region28
        $region27: #{tpu_custom_call.1} parent=23 // pred_region
          %s166 = sand.u32 %s36, 1
          %s167 = scalar_lea.sflag [#allocation5], %s166
          %s168 = sand.u32 %s36, 1
          %s169 = smul.addr %s168, 8
          %s170 = scalar_lea.vmem [#allocation4], %s169
          %s172 = ssub.s32 128, 128
          %173 = vsyncadd %s167, %s172
          %s174 = smul.addr %s19, 4
          %s175 = sadd.s32 %s20, %s174
          %s176 = smul.addr %s175, 128
          %s177 = scalar_lea.hbm %s0, %s176
          %s179 = sshll.u32 %s170, 4
          %s180 = int_to_ptr.vmem [resolvable:$true] %s179
          %182 = dma.hbm_to_vmem [thread:$0]  %s177, 128, %s180, %s167
        $region28: #{tpu_custom_call.1} parent=23 // pred_fallthru
          _
      $region24: #{tpu_custom_call.1} parent=5 // pred_fallthru
        _
      %p183 = scmp.le.s32.totalorder 1, %s12
      %p184 = scmp.lt.s32.totalorder %s12, 5
      %p185 = pnand %p183, %p184
      %p186 = pneg %p185
      // Predicated region
      $region29: #{tpu_custom_call.1} parent=5 // pred_check
        _
      $region30: #{tpu_custom_call.1} parent=5 // pred_check_branch
        %188 = sbr.rel (%p185) target = $region32
      $region31: #{tpu_custom_call.1} parent=5 // pred_region
        %s189 = ssub.s32 %s12, 1
        %s190 = sand.u32 %s39, 1
        %s191 = scalar_lea.sflag [#allocation5], %s190
        %s192 = sand.u32 %s39, 1
        %s193 = smul.addr %s192, 8
        %s194 = scalar_lea.vmem [#allocation4], %s193
        // Predicated region
        $region33: #{tpu_custom_call.1} parent=31 // pred_check
          %p195 = pneg %p52
        $region34: #{tpu_custom_call.1} parent=31 // pred_check_branch
          %197 = sbr.rel (%p195) target = $region36
        $region35: #{tpu_custom_call.1} parent=31 // pred_region
          %198 = dma.done %s191, 128
        $region36: #{tpu_custom_call.1} parent=31 // pred_fallthru
          _
        %s199 = sand.u32 %s39, 1
        %s200 = scalar_lea.sflag [#allocation5], %s199
        %s201 = sand.u32 %s39, 1
        %s202 = smul.addr %s201, 8
        %s203 = scalar_lea.vmem [#allocation4], %s202
        %p204 = pneg %p52
        %p205 = pneg %p49
        %p206 = scmp.lt.s32.totalorder %s21, 0
        %s207 = scalar_select %p206, %s21, 0
        %s208 = smul.addr %s207, 8
        %s209 = scalar_lea.vmem %s1, %s208
        %p210 = pneg %p78
        %p211 = pneg %p75
        %p212 = scmp.lt.s32.totalorder %s21, 0
        %s213 = scalar_select %p212, %s21, 0
        %s214 = smul.addr %s213, 8
        %s215 = scalar_lea.vmem %s2, %s214
        %p216 = pneg %p104
        %p217 = pneg %p101
        %p218 = pneg %p130
        %p219 = pneg %p127
        %p220 = scmp.lt.s32.totalorder %s21, 0
        %s221 = scalar_select %p220, %s21, 0
        %s222 = smul.addr %s221, 8
        %s223 = scalar_lea.vmem %s3, %s222
        %p224 = scmp.lt.s32.totalorder %s21, 0
        %s225 = scalar_select %p224, %s21, 0
        %s226 = smul.addr %s225, 8
        %s227 = scalar_lea.vmem %s1, %s226
        %p228 = scmp.lt.s32.totalorder %s21, 0
        %s229 = scalar_select %p228, %s21, 0
        %s230 = smul.addr %s229, 8
        %s231 = scalar_lea.vmem %s2, %s230
        %p232 = scmp.lt.s32.totalorder %s21, 0
        %s233 = scalar_select %p232, %s21, 0
        %s234 = smul.addr %s233, 8
        %s235 = scalar_lea.vmem %s3, %s234
        %p236 = scmp.eq.s32.totalorder %s22, 0
        // Predicated region
        $region37: #{tpu_custom_call.1} parent=31 // pred_check
          %p237 = pneg %p236
        $region38: #{tpu_custom_call.1} parent=31 // pred_check_branch
          %239 = sbr.rel (%p237) target = $region40
        $region39: #{tpu_custom_call.1} parent=31 // pred_region
          %vm240 = vcmask 7168
          %241 = vst.msk [vmem:[#allocation2] sm:$0xff] %vm240, -inf
          %242 = vst.msk [vmem:[#allocation3] sm:$0xff] %vm240, 0.0
        $region40: #{tpu_custom_call.1} parent=31 // pred_fallthru
          _
        %v243 = vld [vmem:[%s194] sm:$0xff]
        %v244 = vmul.f32 %v243, 30.0
        %v245 = vld [vmem:[#allocation2] sm:$0xff]
        %246 = vmax.xlane.f32.xlu0 %v244
        %v247 = vpop.xlane.xlu0 %246
        %v248 = vmax.f32 %v245, %v247
        %v249 = vld [vmem:[#allocation3] sm:$0xff]
        %v250 = vsub.f32 %v245, %v248
        %v251 = vmul.f32 %v250, 1.442695
        %v252 = vpow.pop %v251
        %v253 = vmul.f32 %v249, %v252
        %255 = vset.pattern.permute.xlu0 0
        %256 = vperm.xlu0 %255, %v248
        %v257 = vpop.permute.xlu0 %256
        %v259 = vsub.f32 %v244, %v257
        %v260 = vmul.f32 %v259, 1.442695
        %v261 = vpow.pop %v260
        %262 = vadd.xlane.f32.xlu0 %v261
        %v263 = vpop.xlane.xlu0 %262
        %v264 = vadd.f32 %v253, %v263
        %vm265 = vcmask 7168
        %266 = vst.msk [vmem:[#allocation3] sm:$0xff] %vm265, %v264
        %267 = vst.msk [vmem:[#allocation2] sm:$0xff] %vm265, %v248
        %p268 = scmp.eq.s32.totalorder %s22, 3
        // Predicated region
        $region41: #{tpu_custom_call.1} parent=31 // pred_check
          %p269 = pneg %p268
        $region42: #{tpu_custom_call.1} parent=31 // pred_check_branch
          %271 = sbr.rel (%p269) target = $region44
        $region43: #{tpu_custom_call.1} parent=31 // pred_region
          %v272 = vld [vmem:[#allocation2] sm:$0xff]
          %v273 = vld [vmem:[#allocation3] sm:$0xff]
          %v274 = vld [vmem:[%s227] sm:$0xff]
          %v275 = vld [vmem:[%s231] sm:$0xff]
          %v276 = vsub.f32 %v274, %v272
          %v277 = vmul.f32 %v276, 1.442695
          %v278 = vpow.pop %v277
          %v279 = vadd.f32 %v273, %v278
          %v280 = vsub.f32 %v275, %v272
          %v281 = vmul.f32 %v280, 1.442695
          %v282 = vpow.pop %v281
          %v283 = vsub.f32 %v279, %v282
          %v284 = vlog2.pop %v283
          %v285 = vmul.f32 %v284, 0.6931472
          %v286 = vadd.f32 %v272, %v285
          %v287 = vsub.f32 %v286, %v274
          %288 = vst.msk [vmem:[%s235] sm:$0xff] %vm265, %v287
        $region44: #{tpu_custom_call.1} parent=31 // pred_fallthru
          _
        %p289 = scmp.lt.s32.totalorder %s21, 0
        %s290 = scalar_select %p289, %s21, 0
        %s291 = smul.addr %s290, 8
        %s292 = scalar_lea.vmem %s3, %s291
        // Predicated region
        $region45: #{tpu_custom_call.1} parent=31 // pred_check
          %p293 = pneg %p127
        $region46: #{tpu_custom_call.1} parent=31 // pred_check_branch
          %295 = sbr.rel (%p293) target = $region48
        $region47: #{tpu_custom_call.1} parent=31 // pred_region
          _
        $region48: #{tpu_custom_call.1} parent=31 // pred_fallthru
          _
        // Predicated region
        $region49: #{tpu_custom_call.1} parent=31 // pred_check
          %p296 = pneg %p127
        $region50: #{tpu_custom_call.1} parent=31 // pred_check_branch
          %298 = sbr.rel (%p296) target = $region52
        $region51: #{tpu_custom_call.1} parent=31 // pred_region
          %p299 = scmp.lt.s32.totalorder %s21, 0
          %s300 = scalar_select %p299, %s21, 0
          %s301 = smul.addr %s300, 8
          %s302 = scalar_lea.vmem %s3, %s301
        $region52: #{tpu_custom_call.1} parent=31 // pred_fallthru
          _
      $region32: #{tpu_custom_call.1} parent=5 // pred_fallthru
        _
      %p303 = scmp.le.s32.totalorder 2, %s12
      // Predicated region
      $region53: #{tpu_custom_call.1} parent=5 // pred_check
        %p304 = pneg %p303
      $region54: #{tpu_custom_call.1} parent=5 // pred_check_branch
        %306 = sbr.rel (%p304) target = $region56
      $region55: #{tpu_custom_call.1} parent=5 // pred_region
        %s307 = ssub.s32 %s12, 2
      $region56: #{tpu_custom_call.1} parent=5 // pred_fallthru
        _
    $region6: #{tpu_custom_call.1} parent=1 // loop_footer
      %s16 = sadd.s32 1, %s12
    $region7: #{tpu_custom_call.1} parent=1 // loop_footer_branch
      %11 = sbr.rel target = $region3
    $region8: #{tpu_custom_call.1} parent=1 // loop_exit
      _
    %308 = vsyncpa [#allocation5], 1
    %s309 = scalar_lea.sflag [#allocation5], 1
    %310 = vsyncpa %s309, 1

</llo_original>
